<compile_context>
chip_gen: v7x
topology: tpu7x:2x2x1
jax: 0.10.0
libtpu: 0.0.40
codegen_flags: <defaults>
</compile_context>

<pallas_src>
import math
import functools

import jax
import jax.numpy as jnp
from jax import lax
from jax.experimental import pallas as pl
from jax.experimental.pallas import tpu as pltpu


def _lm_head_kernel(x_ref, wt_ref, bt_ref, g_ref, beta_ref, wd_ref, bd_ref,
                    o_ref, t_ref, *, eps):
    """Grid = (token tiles i, vocab tiles j). Vocab axis must stay innermost &
    sequentially executed ('arbitrary'): t_ref is filled at j==0 and reused."""
    j = pl.program_id(1)

    # --- Transform: dense -> GELU(erf) -> LayerNorm, computed once per token tile. ---
    @pl.when(j == 0)
    def _():
        y = jnp.dot(x_ref[...], wt_ref[...], preferred_element_type=jnp.float32)
        y = y + bt_ref[...].astype(jnp.float32)

        # GELU (erf formulation, matches the torch.erf-based gelu in the reference).
        y = y * 0.5 * (1.0 + lax.erf(y * (1.0 / math.sqrt(2.0))))

        # Two-pass LayerNorm (mean-subtracted variance, like BertLayerNorm).
        inv_h = 1.0 / float(y.shape[-1])
        mean = jnp.sum(y, axis=-1, keepdims=True) * inv_h
        c = y - mean
        var = jnp.sum(c * c, axis=-1, keepdims=True) * inv_h
        y = c * lax.rsqrt(var + eps)
        y = y * g_ref[...].astype(jnp.float32) + beta_ref[...].astype(jnp.float32)

        # Written once in the decoder matmul operand dtype -> no per-vocab-step cast.
        t_ref[...] = y.astype(t_ref.dtype)

    # --- Decoder: logits tile = transform(x) @ W_emb[j-tile].T + bias[j-tile]. ---
    # wd_ref is a [tv, H] slice of the tied embedding table; contract over H (dim 1
    # of both operands) so no HBM-side transpose of the embedding table is needed.
    logits = lax.dot_general(
        t_ref[...], wd_ref[...],
        dimension_numbers=(((1,), (1,)), ((), ())),
        preferred_element_type=jnp.float32)
    logits = logits + bd_ref[...].astype(jnp.float32)
    o_ref[...] = logits.astype(o_ref.dtype)


def _round_up(x, m):
    return (x + m - 1) // m * m


def _device_defaults():
    """Per-TPU-generation tile sizes and scoped-VMEM limits."""
    try:
        kind = jax.devices()[0].device_kind.lower()
    except Exception:
        kind = ""
    if "v7" in kind:   # 64 MiB VMEM per TensorCore, 2 TCs/chip, ridge ~311 F/B
        return dict(tn=1024, tv=1024, vmem=52 * 1024 * 1024, split_tokens=True)
    if "v6" in kind:   # 128 MiB VMEM, ridge ~680 F/B -> biggest token tile
        return dict(tn=2048, tv=1024, vmem=96 * 1024 * 1024, split_tokens=False)
    if "v5" in kind:   # v5e/v5p, 128 MiB VMEM, lowest HBM BW -> big tn mandatory
        return dict(tn=1024, tv=1024, vmem=64 * 1024 * 1024, split_tokens=False)
    # Unknown / older generation: conservative settings.
    return dict(tn=512, tv=512, vmem=32 * 1024 * 1024, split_tokens=False)


def _vmem_bytes(tn, tv, h, w_isz, scratch_isz, out_isz):
    """Rough pipeline working-set estimate (double buffers where applicable)."""
    x_buf = 2 * tn * h * w_isz               # streamed x tile
    wt_buf = 1 * h * h * w_isz               # pinned transform weight (single buffer)
    small = 3 * h * w_isz + 2 * tv * w_isz   # LN params / biases
    wd_buf = 2 * tv * h * w_isz              # streamed decoder-weight tile
    out_buf = 2 * tn * tv * out_isz          # streamed output tile
    scratch = tn * h * scratch_isz           # transform(x) scratch
    return x_buf + wt_buf + small + wd_buf + out_buf + scratch


def bert_lm_prediction_head(x, w_t, b_t, gamma, beta, emb_weights, dec_bias,
                            *, eps=1e-12, tn=None, tv=None,
                            vmem_limit_bytes=None, matmul_dtype=None):
    """BertLMPredictionHead forward.

    x            : [N, H] tokens (batch*seq flattened)
    w_t          : [H, H] transform dense weight, stored (in, out)
    b_t, gamma, beta : [H]
    emb_weights  : [V, H] tied embedding weights (PyTorch decoder layout, used as-is)
    dec_bias     : [V]
    matmul_dtype : optional dtype (e.g. jnp.bfloat16) to cast matmul operands to for
                   f32 checkpoints.  Prefer pre-casting the weights at load time.
    Returns logits [N, V].
    """
    n, h = x.shape
    v = emb_weights.shape[0]

    if matmul_dtype is not None:
        # For production, cast the weights once at load time instead of per call.
        x = x.astype(matmul_dtype)
        w_t = w_t.astype(matmul_dtype)
        emb_weights = emb_weights.astype(matmul_dtype)

    cfg = _device_defaults()
    tn = cfg["tn"] if tn is None else tn
    tv = cfg["tv"] if tv is None else tv
    vmem_limit_bytes = cfg["vmem"] if vmem_limit_bytes is None else vmem_limit_bytes

    # v7x megacore guard: keep >= 2 token tiles so both TensorCores get work on
    # small-batch shapes (token axis is the "parallel" one).
    if cfg["split_tokens"] and n > 8 and pl.cdiv(n, tn) < 2:
        tn = max(8, _round_up(pl.cdiv(n, 2), 8))

    # Tile-shape legality: sublane tile multiple of 8 (or full dim), lane tile
    # multiple of 128 (or full dim).
    if n <= tn:
        tn = n
    else:
        tn = max(8, (tn // 8) * 8)
    if v <= tv:
        tv = v
    else:
        tv = max(128, (tv // 128) * 128)
    # NOTE: if v is not a multiple of tv the last vocab tile is ragged (masked
    # stores).  For production, pad V at weight-prep time; we deliberately do NOT
    # pad/copy the [V, H] embedding table per call here.

    # Shrink tiles until the estimated VMEM working set fits under the scoped limit.
    w_isz = jnp.dtype(emb_weights.dtype).itemsize
    out_isz = jnp.dtype(x.dtype).itemsize
    scratch_dtype = emb_weights.dtype            # decoder LHS operand dtype
    s_isz = jnp.dtype(scratch_dtype).itemsize
    budget = int(0.75 * vmem_limit_bytes)
    while _vmem_bytes(tn, tv, h, w_isz, s_isz, out_isz) > budget:
        if tv > 512 and tv < v:
            tv //= 2
        elif tn > 256 and tn < n:
            tn = max(256, tn // 2)
        elif tv > 128 and tv < v:
            tv //= 2
        else:
            break

    bt2 = b_t.reshape(1, h)
    g2 = gamma.reshape(1, h)
    beta2 = beta.reshape(1, h)
    bd2 = dec_bias.reshape(1, v)

    kernel = functools.partial(_lm_head_kernel, eps=eps)

    grid = (pl.cdiv(n, tn), pl.cdiv(v, tv))
    tok_tiles = grid[0]
    x_isz = jnp.dtype(x.dtype).itemsize
    cost = pl.CostEstimate(
        flops=2 * n * h * h + 2 * n * h * v,
        transcendentals=n * h,
        bytes_accessed=(n * h + h * h) * x_isz
        + tok_tiles * v * h * w_isz          # decoder weight re-streamed per token tile
        + n * v * out_isz,
    )

    def build(single_buffer_pinned):
        pinned_kwargs = (
            dict(pipeline_mode=pl.Buffered(buffer_count=1))
            if single_buffer_pinned else {})
        in_specs = [
            pl.BlockSpec((tn, h), lambda i, j: (i, 0)),                  # x tile
            pl.BlockSpec((h, h), lambda i, j: (0, 0), **pinned_kwargs),  # transform W
            pl.BlockSpec((1, h), lambda i, j: (0, 0), **pinned_kwargs),  # transform bias
            pl.BlockSpec((1, h), lambda i, j: (0, 0), **pinned_kwargs),  # LN gamma
            pl.BlockSpec((1, h), lambda i, j: (0, 0), **pinned_kwargs),  # LN beta
            pl.BlockSpec((tv, h), lambda i, j: (j, 0)),                  # decoder W tile [tv, H]
            pl.BlockSpec((1, tv), lambda i, j: (0, j)),                  # decoder bias tile
        ]
        return pl.pallas_call(
            kernel,
            out_shape=jax.ShapeDtypeStruct((n, v), x.dtype),
            grid_spec=pltpu.PrefetchScalarGridSpec(
                num_scalar_prefetch=0,
                grid=grid,
                in_specs=in_specs,
                out_specs=pl.BlockSpec((tn, tv), lambda i, j: (i, j)),
                scratch_shapes=[pltpu.VMEM((tn, h), scratch_dtype)],
            ),
            compiler_params=pltpu.CompilerParams(
                dimension_semantics=("parallel", "arbitrary"),
                vmem_limit_bytes=vmem_limit_bytes,
            ),
            cost_estimate=cost,
        )

    try:
        return build(True)(x, w_t, bt2, g2, beta2, emb_weights, bd2)
    except Exception:
        # Fallback if this JAX build rejects single-buffered pinned BlockSpecs.
        return build(False)(x, w_t, bt2, g2, beta2, emb_weights, bd2)


if __name__ == "__main__":
    # Small, lane-aligned demo shapes (H multiple of 128, N multiple of 8).
    batch, seq, hidden, vocab = 2, 8, 128, 256
    eps = 1e-12

    key = jax.random.PRNGKey(0)
    kx, kw, kb, kg, kbeta, kemb, kdb = jax.random.split(key, 7)

    x = jax.random.normal(kx, (batch, seq, hidden), dtype=jnp.float32)
    w_t = jax.random.normal(kw, (hidden, hidden), dtype=jnp.float32) * 0.02    # [in, out]
    b_t = jax.random.normal(kb, (hidden,), dtype=jnp.float32) * 0.02
    gamma = jnp.ones((hidden,), dtype=jnp.float32) + 0.1 * jax.random.normal(
        kg, (hidden,), dtype=jnp.float32)
    beta = 0.1 * jax.random.normal(kbeta, (hidden,), dtype=jnp.float32)
    emb_w = jax.random.normal(kemb, (vocab, hidden), dtype=jnp.float32) * 0.02  # [V, H]
    dec_b = jax.random.normal(kdb, (vocab,), dtype=jnp.float32) * 0.02

    # Flatten tokens -> [N, H] for the kernel, restore shape afterwards.
    x2d = x.reshape(batch * seq, hidden)
    logits = bert_lm_prediction_head(x2d, w_t, b_t, gamma, beta, emb_w, dec_b, eps=eps)
    logits = logits.reshape(batch, seq, vocab)
    jax.block_until_ready(logits)

    # Pure-JAX reference (mirrors the PyTorch forward).
    t_ref = x2d @ w_t + b_t
    t_ref = t_ref * 0.5 * (1.0 + jax.lax.erf(t_ref / jnp.sqrt(2.0)))
    mu = jnp.mean(t_ref, axis=-1, keepdims=True)
    var = jnp.mean((t_ref - mu) ** 2, axis=-1, keepdims=True)
    t_ref = (t_ref - mu) / jnp.sqrt(var + eps) * gamma + beta
    logits_ref = (t_ref @ emb_w.T + dec_b).reshape(batch, seq, vocab)

    assert jnp.allclose(logits, logits_ref, atol=1e-4, rtol=1e-4), "mismatch vs reference"

    print("KERNEL_OK")
</pallas_src>

<mosaic_0001>
module attributes {stable_mosaic.version = 11 : i64} {
  func.func @_lm_head_kernel(%arg0: i32, %arg1: i32, %arg2: memref<16x128xf32, #tpu.memory_space<vmem>>, %arg3: memref<128x128xf32, #tpu.memory_space<vmem>>, %arg4: memref<1x128xf32, #tpu.memory_space<vmem>>, %arg5: memref<1x128xf32, #tpu.memory_space<vmem>>, %arg6: memref<1x128xf32, #tpu.memory_space<vmem>>, %arg7: memref<256x128xf32, #tpu.memory_space<vmem>>, %arg8: memref<1x256xf32, #tpu.memory_space<vmem>>, %arg9: memref<16x256xf32, #tpu.memory_space<vmem>>, %arg10: memref<16x128xf32, #tpu.memory_space<vmem>>) attributes {dimension_semantics = [#tpu.dimension_semantics<parallel>, #tpu.dimension_semantics<arbitrary>], iteration_bounds = array<i64: 1, 1>, scalar_prefetch = 0 : i64, scratch_operands = 1 : i64, tpu.core_type = #tpu.core_type<tc>, window_params = [{transform_indices = @transform_0, window_bounds = array<i64: 16, 128>}, {pipeline_mode = #tpu.pipeline_mode<synchronous>, transform_indices = @transform_1, window_bounds = array<i64: 128, 128>}, {pipeline_mode = #tpu.pipeline_mode<synchronous>, transform_indices = @transform_2, window_bounds = array<i64: 1, 128>}, {pipeline_mode = #tpu.pipeline_mode<synchronous>, transform_indices = @transform_3, window_bounds = array<i64: 1, 128>}, {pipeline_mode = #tpu.pipeline_mode<synchronous>, transform_indices = @transform_4, window_bounds = array<i64: 1, 128>}, {transform_indices = @transform_5, window_bounds = array<i64: 256, 128>}, {transform_indices = @transform_6, window_bounds = array<i64: 1, 256>}, {transform_indices = @transform_7, window_bounds = array<i64: 16, 256>}]} {
    %c0_i32 = arith.constant 0 : i32
    %0 = arith.cmpi eq, %arg1, %c0_i32 : i32
    %1 = arith.extui %0 : i1 to i32
    %c0_i32_0 = arith.constant 0 : i32
    %2 = arith.cmpi ne, %1, %c0_i32_0 : i32
    scf.if %2 {
      %c0_8 = arith.constant 0 : index
      %c0_9 = arith.constant 0 : index
      %10 = vector.load %arg2[%c0_8, %c0_9] : memref<16x128xf32, #tpu.memory_space<vmem>>, vector<16x128xf32>
      %c0_10 = arith.constant 0 : index
      %c0_11 = arith.constant 0 : index
      %11 = vector.load %arg3[%c0_10, %c0_11] : memref<128x128xf32, #tpu.memory_space<vmem>>, vector<128x128xf32>
      %cst_12 = arith.constant dense<0.000000e+00> : vector<16x128xf32>
      %12 = tpu.matmul %10, %11, %cst_12 {dimension_numbers = #tpu.dot_dimension_numbers<[1], [0], [0], [1], [0, 0, 1, 1], [], []>} : vector<16x128xf32>, vector<128x128xf32>, vector<16x128xf32> -> vector<16x128xf32>
      %c0_13 = arith.constant 0 : index
      %c0_14 = arith.constant 0 : index
      %13 = vector.load %arg4[%c0_13, %c0_14] : memref<1x128xf32, #tpu.memory_space<vmem>>, vector<1x128xf32>
      %14 = vector.broadcast %13 : vector<1x128xf32> to vector<16x128xf32>
      %15 = arith.addf %12, %14 : vector<16x128xf32>
      %cst_15 = arith.constant 5.000000e-01 : f32
      %16 = vector.broadcast %cst_15 : f32 to vector<16x128xf32>
      %17 = arith.mulf %15, %16 : vector<16x128xf32>
      %cst_16 = arith.constant 0.707106769 : f32
      %18 = vector.broadcast %cst_16 : f32 to vector<16x128xf32>
      %19 = arith.mulf %15, %18 : vector<16x128xf32>
      %20 = math.erf %19 : vector<16x128xf32>
      %cst_17 = arith.constant 1.000000e+00 : f32
      %21 = vector.broadcast %cst_17 : f32 to vector<16x128xf32>
      %22 = arith.addf %21, %20 : vector<16x128xf32>
      %23 = arith.mulf %17, %22 : vector<16x128xf32>
      %cst_18 = arith.constant dense<0.000000e+00> : vector<16xf32>
      %24 = vector.multi_reduction <add>, %23, %cst_18 [1] : vector<16x128xf32> to vector<16xf32>
      %25 = vector.shape_cast %24 : vector<16xf32> to vector<16x1xf32>
      %cst_19 = arith.constant 7.812500e-03 : f32
      %26 = vector.broadcast %cst_19 : f32 to vector<16x1xf32>
      %27 = arith.mulf %25, %26 : vector<16x1xf32>
      %28 = vector.broadcast %27 : vector<16x1xf32> to vector<16x128xf32>
      %29 = arith.subf %23, %28 : vector<16x128xf32>
      %30 = arith.mulf %29, %29 : vector<16x128xf32>
      %cst_20 = arith.constant dense<0.000000e+00> : vector<16xf32>
      %31 = vector.multi_reduction <add>, %30, %cst_20 [1] : vector<16x128xf32> to vector<16xf32>
      %32 = vector.shape_cast %31 : vector<16xf32> to vector<16x1xf32>
      %cst_21 = arith.constant 7.812500e-03 : f32
      %33 = vector.broadcast %cst_21 : f32 to vector<16x1xf32>
      %34 = arith.mulf %32, %33 : vector<16x1xf32>
      %cst_22 = arith.constant 9.99999996E-13 : f32
      %35 = vector.broadcast %cst_22 : f32 to vector<16x1xf32>
      %36 = arith.addf %34, %35 : vector<16x1xf32>
      %37 = math.rsqrt %36 : vector<16x1xf32>
      %38 = vector.broadcast %37 : vector<16x1xf32> to vector<16x128xf32>
      %39 = arith.mulf %29, %38 : vector<16x128xf32>
      %c0_23 = arith.constant 0 : index
      %c0_24 = arith.constant 0 : index
      %40 = vector.load %arg5[%c0_23, %c0_24] : memref<1x128xf32, #tpu.memory_space<vmem>>, vector<1x128xf32>
      %41 = vector.broadcast %40 : vector<1x128xf32> to vector<16x128xf32>
      %42 = arith.mulf %39, %41 : vector<16x128xf32>
      %c0_25 = arith.constant 0 : index
      %c0_26 = arith.constant 0 : index
      %43 = vector.load %arg6[%c0_25, %c0_26] : memref<1x128xf32, #tpu.memory_space<vmem>>, vector<1x128xf32>
      %44 = vector.broadcast %43 : vector<1x128xf32> to vector<16x128xf32>
      %45 = arith.addf %42, %44 : vector<16x128xf32>
      %c0_27 = arith.constant 0 : index
      %c0_28 = arith.constant 0 : index
      %46 = vector.load %arg10[%c0_27, %c0_28] : memref<16x128xf32, #tpu.memory_space<vmem>>, vector<16x128xf32>
      tpu.vector_store %arg10[%c0_27, %c0_28], %45 {strides = array<i32>} : memref<16x128xf32, #tpu.memory_space<vmem>>, vector<16x128xf32>,
    } else {
    }
    %c0 = arith.constant 0 : index
    %c0_1 = arith.constant 0 : index
    %3 = vector.load %arg10[%c0, %c0_1] : memref<16x128xf32, #tpu.memory_space<vmem>>, vector<16x128xf32>
    %c0_2 = arith.constant 0 : index
    %c0_3 = arith.constant 0 : index
    %4 = vector.load %arg7[%c0_2, %c0_3] : memref<256x128xf32, #tpu.memory_space<vmem>>, vector<256x128xf32>
    %cst = arith.constant dense<0.000000e+00> : vector<16x256xf32>
    %5 = tpu.matmul %3, %4, %cst {dimension_numbers = #tpu.dot_dimension_numbers<[1], [1], [0], [0], [0, 0, 1, 0], [], []>} : vector<16x128xf32>, vector<256x128xf32>, vector<16x256xf32> -> vector<16x256xf32>
    %c0_4 = arith.constant 0 : index
    %c0_5 = arith.constant 0 : index
    %6 = vector.load %arg8[%c0_4, %c0_5] : memref<1x256xf32, #tpu.memory_space<vmem>>, vector<1x256xf32>
    %7 = vector.broadcast %6 : vector<1x256xf32> to vector<16x256xf32>
    %8 = arith.addf %5, %7 : vector<16x256xf32>
    %c0_6 = arith.constant 0 : index
    %c0_7 = arith.constant 0 : index
    %9 = vector.load %arg9[%c0_6, %c0_7] : memref<16x256xf32, #tpu.memory_space<vmem>>, vector<16x256xf32>
    tpu.vector_store %arg9[%c0_6, %c0_7], %8 {strides = array<i32>} : memref<16x256xf32, #tpu.memory_space<vmem>>, vector<16x256xf32>,
    return
  }
  func.func @transform_0(%arg0: i32, %arg1: i32) -> (i32, i32) {
    %c0_i32 = arith.constant 0 : i32
    %c0_i32_0 = arith.constant 0 : i32
    return %arg0, %c0_i32 : i32, i32
  }
  func.func @transform_1(%arg0: i32, %arg1: i32) -> (i32, i32) {
    %c0_i32 = arith.constant 0 : i32
    %c0_i32_0 = arith.constant 0 : i32
    %c0_i32_1 = arith.constant 0 : i32
    return %c0_i32, %c0_i32_0 : i32, i32
  }
  func.func @transform_2(%arg0: i32, %arg1: i32) -> (i32, i32) {
    %c0_i32 = arith.constant 0 : i32
    %c0_i32_0 = arith.constant 0 : i32
    %c0_i32_1 = arith.constant 0 : i32
    return %c0_i32, %c0_i32_0 : i32, i32
  }
  func.func @transform_3(%arg0: i32, %arg1: i32) -> (i32, i32) {
    %c0_i32 = arith.constant 0 : i32
    %c0_i32_0 = arith.constant 0 : i32
    %c0_i32_1 = arith.constant 0 : i32
    return %c0_i32, %c0_i32_0 : i32, i32
  }
  func.func @transform_4(%arg0: i32, %arg1: i32) -> (i32, i32) {
    %c0_i32 = arith.constant 0 : i32
    %c0_i32_0 = arith.constant 0 : i32
    %c0_i32_1 = arith.constant 0 : i32
    return %c0_i32, %c0_i32_0 : i32, i32
  }
  func.func @transform_5(%arg0: i32, %arg1: i32) -> (i32, i32) {
    %c0_i32 = arith.constant 0 : i32
    %c0_i32_0 = arith.constant 0 : i32
    return %arg1, %c0_i32 : i32, i32
  }
  func.func @transform_6(%arg0: i32, %arg1: i32) -> (i32, i32) {
    %c0_i32 = arith.constant 0 : i32
    %c0_i32_0 = arith.constant 0 : i32
    return %c0_i32, %arg1 : i32, i32
  }
  func.func @transform_7(%arg0: i32, %arg1: i32) -> (i32, i32) {
    %c0_i32 = arith.constant 0 : i32
    return %arg0, %arg1 : i32, i32
  }
}

module attributes {stable_mosaic.version = 11 : i64} {
  func.func @_lm_head_kernel(%arg0: i32, %arg1: i32, %arg2: memref<16x128xf32, #tpu.memory_space<vmem>>, %arg3: memref<128x128xf32, #tpu.memory_space<vmem>>, %arg4: memref<1x128xf32, #tpu.memory_space<vmem>>, %arg5: memref<1x128xf32, #tpu.memory_space<vmem>>, %arg6: memref<1x128xf32, #tpu.memory_space<vmem>>, %arg7: memref<256x128xf32, #tpu.memory_space<vmem>>, %arg8: memref<1x256xf32, #tpu.memory_space<vmem>>, %arg9: memref<16x256xf32, #tpu.memory_space<vmem>>, %arg10: memref<16x128xf32, #tpu.memory_space<vmem>>) attributes {dimension_semantics = [#tpu.dimension_semantics<parallel>, #tpu.dimension_semantics<arbitrary>], iteration_bounds = array<i64: 1, 1>, scalar_prefetch = 0 : i64, scratch_operands = 1 : i64, tpu.core_type = #tpu.core_type<tc>, window_params = [{transform_indices = @transform_0, window_bounds = array<i64: 16, 128>}, {pipeline_mode = #tpu.pipeline_mode<synchronous>, transform_indices = @transform_1, window_bounds = array<i64: 128, 128>}, {pipeline_mode = #tpu.pipeline_mode<synchronous>, transform_indices = @transform_2, window_bounds = array<i64: 1, 128>}, {pipeline_mode = #tpu.pipeline_mode<synchronous>, transform_indices = @transform_3, window_bounds = array<i64: 1, 128>}, {pipeline_mode = #tpu.pipeline_mode<synchronous>, transform_indices = @transform_4, window_bounds = array<i64: 1, 128>}, {transform_indices = @transform_5, window_bounds = array<i64: 256, 128>}, {transform_indices = @transform_6, window_bounds = array<i64: 1, 256>}, {transform_indices = @transform_7, window_bounds = array<i64: 16, 256>}]} {
    %c0_i32 = arith.constant 0 : i32
    %0 = arith.cmpi eq, %arg1, %c0_i32 : i32
    %1 = arith.extui %0 : i1 to i32
    %c0_i32_0 = arith.constant 0 : i32
    %2 = arith.cmpi ne, %1, %c0_i32_0 : i32
    scf.if %2 {
      %c0_8 = arith.constant 0 : index
      %c0_9 = arith.constant 0 : index
      %10 = vector.load %arg2[%c0_8, %c0_9] : memref<16x128xf32, #tpu.memory_space<vmem>>, vector<16x128xf32>
      %c0_10 = arith.constant 0 : index
      %c0_11 = arith.constant 0 : index
      %11 = vector.load %arg3[%c0_10, %c0_11] : memref<128x128xf32, #tpu.memory_space<vmem>>, vector<128x128xf32>
      %cst_12 = arith.constant dense<0.000000e+00> : vector<16x128xf32>
      %12 = tpu.matmul %10, %11, %cst_12 {dimension_numbers = #tpu.dot_dimension_numbers<[1], [0], [0], [1], [0, 0, 1, 1], [], []>} : vector<16x128xf32>, vector<128x128xf32>, vector<16x128xf32> -> vector<16x128xf32>
      %c0_13 = arith.constant 0 : index
      %c0_14 = arith.constant 0 : index
      %13 = vector.load %arg4[%c0_13, %c0_14] : memref<1x128xf32, #tpu.memory_space<vmem>>, vector<1x128xf32>
      %14 = vector.broadcast %13 : vector<1x128xf32> to vector<16x128xf32>
      %15 = arith.addf %12, %14 : vector<16x128xf32>
      %cst_15 = arith.constant 5.000000e-01 : f32
      %16 = vector.broadcast %cst_15 : f32 to vector<16x128xf32>
      %17 = arith.mulf %15, %16 : vector<16x128xf32>
      %cst_16 = arith.constant 0.707106769 : f32
      %18 = vector.broadcast %cst_16 : f32 to vector<16x128xf32>
      %19 = arith.mulf %15, %18 : vector<16x128xf32>
      %20 = math.erf %19 : vector<16x128xf32>
      %cst_17 = arith.constant 1.000000e+00 : f32
      %21 = vector.broadcast %cst_17 : f32 to vector<16x128xf32>
      %22 = arith.addf %21, %20 : vector<16x128xf32>
      %23 = arith.mulf %17, %22 : vector<16x128xf32>
      %cst_18 = arith.constant dense<0.000000e+00> : vector<16xf32>
      %24 = vector.multi_reduction <add>, %23, %cst_18 [1] : vector<16x128xf32> to vector<16xf32>
      %25 = vector.shape_cast %24 : vector<16xf32> to vector<16x1xf32>
      %cst_19 = arith.constant 7.812500e-03 : f32
      %26 = vector.broadcast %cst_19 : f32 to vector<16x1xf32>
      %27 = arith.mulf %25, %26 : vector<16x1xf32>
      %28 = vector.broadcast %27 : vector<16x1xf32> to vector<16x128xf32>
      %29 = arith.subf %23, %28 : vector<16x128xf32>
      %30 = arith.mulf %29, %29 : vector<16x128xf32>
      %cst_20 = arith.constant dense<0.000000e+00> : vector<16xf32>
      %31 = vector.multi_reduction <add>, %30, %cst_20 [1] : vector<16x128xf32> to vector<16xf32>
      %32 = vector.shape_cast %31 : vector<16xf32> to vector<16x1xf32>
      %cst_21 = arith.constant 7.812500e-03 : f32
      %33 = vector.broadcast %cst_21 : f32 to vector<16x1xf32>
      %34 = arith.mulf %32, %33 : vector<16x1xf32>
      %cst_22 = arith.constant 9.99999996E-13 : f32
      %35 = vector.broadcast %cst_22 : f32 to vector<16x1xf32>
      %36 = arith.addf %34, %35 : vector<16x1xf32>
      %37 = math.rsqrt %36 : vector<16x1xf32>
      %38 = vector.broadcast %37 : vector<16x1xf32> to vector<16x128xf32>
      %39 = arith.mulf %29, %38 : vector<16x128xf32>
      %c0_23 = arith.constant 0 : index
      %c0_24 = arith.constant 0 : index
      %40 = vector.load %arg5[%c0_23, %c0_24] : memref<1x128xf32, #tpu.memory_space<vmem>>, vector<1x128xf32>
      %41 = vector.broadcast %40 : vector<1x128xf32> to vector<16x128xf32>
      %42 = arith.mulf %39, %41 : vector<16x128xf32>
      %c0_25 = arith.constant 0 : index
      %c0_26 = arith.constant 0 : index
      %43 = vector.load %arg6[%c0_25, %c0_26] : memref<1x128xf32, #tpu.memory_space<vmem>>, vector<1x128xf32>
      %44 = vector.broadcast %43 : vector<1x128xf32> to vector<16x128xf32>
      %45 = arith.addf %42, %44 : vector<16x128xf32>
      %c0_27 = arith.constant 0 : index
      %c0_28 = arith.constant 0 : index
      %46 = vector.load %arg10[%c0_27, %c0_28] : memref<16x128xf32, #tpu.memory_space<vmem>>, vector<16x128xf32>
      tpu.vector_store %arg10[%c0_27, %c0_28], %45 {strides = array<i32>} : memref<16x128xf32, #tpu.memory_space<vmem>>, vector<16x128xf32>,
    } else {
    }
    %c0 = arith.constant 0 : index
    %c0_1 = arith.constant 0 : index
    %3 = vector.load %arg10[%c0, %c0_1] : memref<16x128xf32, #tpu.memory_space<vmem>>, vector<16x128xf32>
    %c0_2 = arith.constant 0 : index
    %c0_3 = arith.constant 0 : index
    %4 = vector.load %arg7[%c0_2, %c0_3] : memref<256x128xf32, #tpu.memory_space<vmem>>, vector<256x128xf32>
    %cst = arith.constant dense<0.000000e+00> : vector<16x256xf32>
    %5 = tpu.matmul %3, %4, %cst {dimension_numbers = #tpu.dot_dimension_numbers<[1], [1], [0], [0], [0, 0, 1, 0], [], []>} : vector<16x128xf32>, vector<256x128xf32>, vector<16x256xf32> -> vector<16x256xf32>
    %c0_4 = arith.constant 0 : index
    %c0_5 = arith.constant 0 : index
    %6 = vector.load %arg8[%c0_4, %c0_5] : memref<1x256xf32, #tpu.memory_space<vmem>>, vector<1x256xf32>
    %7 = vector.broadcast %6 : vector<1x256xf32> to vector<16x256xf32>
    %8 = arith.addf %5, %7 : vector<16x256xf32>
    %c0_6 = arith.constant 0 : index
    %c0_7 = arith.constant 0 : index
    %9 = vector.load %arg9[%c0_6, %c0_7] : memref<16x256xf32, #tpu.memory_space<vmem>>, vector<16x256xf32>
    tpu.vector_store %arg9[%c0_6, %c0_7], %8 {strides = array<i32>} : memref<16x256xf32, #tpu.memory_space<vmem>>, vector<16x256xf32>,
    return
  }
  func.func @transform_0(%arg0: i32, %arg1: i32) -> (i32, i32) {
    %c0_i32 = arith.constant 0 : i32
    %c0_i32_0 = arith.constant 0 : i32
    return %arg0, %c0_i32 : i32, i32
  }
  func.func @transform_1(%arg0: i32, %arg1: i32) -> (i32, i32) {
    %c0_i32 = arith.constant 0 : i32
    %c0_i32_0 = arith.constant 0 : i32
    %c0_i32_1 = arith.constant 0 : i32
    return %c0_i32, %c0_i32_0 : i32, i32
  }
  func.func @transform_2(%arg0: i32, %arg1: i32) -> (i32, i32) {
    %c0_i32 = arith.constant 0 : i32
    %c0_i32_0 = arith.constant 0 : i32
    %c0_i32_1 = arith.constant 0 : i32
    return %c0_i32, %c0_i32_0 : i32, i32
  }
  func.func @transform_3(%arg0: i32, %arg1: i32) -> (i32, i32) {
    %c0_i32 = arith.constant 0 : i32
    %c0_i32_0 = arith.constant 0 : i32
    %c0_i32_1 = arith.constant 0 : i32
    return %c0_i32, %c0_i32_0 : i32, i32
  }
  func.func @transform_4(%arg0: i32, %arg1: i32) -> (i32, i32) {
    %c0_i32 = arith.constant 0 : i32
    %c0_i32_0 = arith.constant 0 : i32
    %c0_i32_1 = arith.constant 0 : i32
    return %c0_i32, %c0_i32_0 : i32, i32
  }
  func.func @transform_5(%arg0: i32, %arg1: i32) -> (i32, i32) {
    %c0_i32 = arith.constant 0 : i32
    %c0_i32_0 = arith.constant 0 : i32
    return %arg1, %c0_i32 : i32, i32
  }
  func.func @transform_6(%arg0: i32, %arg1: i32) -> (i32, i32) {
    %c0_i32 = arith.constant 0 : i32
    %c0_i32_0 = arith.constant 0 : i32
    return %c0_i32, %arg1 : i32, i32
  }
  func.func @transform_7(%arg0: i32, %arg1: i32) -> (i32, i32) {
    %c0_i32 = arith.constant 0 : i32
    return %arg0, %arg1 : i32, i32
  }
}

</mosaic_0001>

<llo_original>
// kernel: tpu_custom_call.1
$region0: #{tpu_custom_call.1}
  #allocation0 [shape = 'u32[]', space=smem, size = 0x4, offset = 0x4, fixed_abs, tag = 'smem constant byte address 0x4 - core index']
  #allocation1 [shape = 'u32[144,128]{1,0:T(1,128)}', space=vmem, size = 0x12000, scoped, tag = 'internal scratch']
  #allocation2 [shape = 'f32[16,128]{1,0:T(8,128)}', space=vmem, size = 0x2000, scoped, tag = 'scratch operand']
  %s0 = inlined_call_operand.hbm [shape: f32[16,128], index: 0, kind: input, shape index: {}]
  %s1 = inlined_call_operand.hbm [shape: f32[128,128], index: 1, kind: input, shape index: {}]
  %s2 = inlined_call_operand.vmem [shape: f32[1,128], index: 2, kind: input, shape index: {}]
  %s3 = inlined_call_operand.vmem [shape: f32[1,128], index: 3, kind: input, shape index: {}]
  %s4 = inlined_call_operand.vmem [shape: f32[1,128], index: 4, kind: input, shape index: {}]
  %s5 = inlined_call_operand.hbm [shape: f32[256,128], index: 5, kind: input, shape index: {}]
  %s6 = inlined_call_operand.vmem [shape: f32[1,256], index: 6, kind: input, shape index: {}]
  %s7 = inlined_call_operand.hbm [shape: f32[16,256], index: 7, kind: output, shape index: {}]
  %s8 = sld [smem:[#allocation0]]
  $region54: #{tpu_custom_call.1} parent=0
    _
  %s10 = ssub.s32 1, %s8
  %s11 = scalar_select 0, %s10, %s8
  $region1: #{tpu_custom_call.1} parent=0
    #allocation3 [shape = 'u8[8192]{0}', space=vmem, size = 0x2000, scoped, tag = 'input window, operand 0, single buffered']
    #allocation4 [shape = 's32[1]{0}', space=sflag, size = 0x4, scoped, tag = 'scoped memory for tpu_custom_call.1']
    #allocation5 [shape = 's32[1]{0}', space=sflag, size = 0x4, scoped, tag = 'scoped memory for tpu_custom_call.1']
    #allocation6 [shape = 'u8[65536]{0}', space=vmem, size = 0x10000, scoped, tag = 'input window, operand 1, single buffered']
    #allocation7 [shape = 's32[1]{0}', space=sflag, size = 0x4, scoped, tag = 'scoped memory for tpu_custom_call.1']
    #allocation8 [shape = 'u8[131072]{0}', space=vmem, size = 0x20000, scoped, tag = 'input window, operand 5, single buffered']
    #allocation9 [shape = 'u8[16384]{0}', space=vmem, size = 0x4000, scoped, tag = 'output window, operand 0, single buffered']
    %12 = vsyncpa [#allocation4], 0
    %13 = vsyncpa [#allocation7], 0
    %14 = vsyncpa [#allocation5], 0
    // Predicated region
    $region2: #{tpu_custom_call.1} parent=1 // pred_check
      _
    $region3: #{tpu_custom_call.1} parent=1 // pred_check_branch
      %16 = sbr.rel (0) target = $region5
    $region4: #{tpu_custom_call.1} parent=1 // pred_region
      %s18 = ssub.s32 256, 256
      %19 = vsyncadd [#allocation4], %s18
      %s20 = sshll.u32 [#allocation3], 4
      %s21 = int_to_ptr.vmem [resolvable:$true] %s20
      %26 = dma.hbm_to_vmem [thread:$0]  %s0, 256, %s21, [#allocation4], 128, 128, 8
    $region5: #{tpu_custom_call.1} parent=1 // pred_fallthru
      _
    // Predicated region
    $region6: #{tpu_custom_call.1} parent=1 // pred_check
      _
    $region7: #{tpu_custom_call.1} parent=1 // pred_check_branch
      %28 = sbr.rel (0) target = $region9
    $region8: #{tpu_custom_call.1} parent=1 // pred_region
      %s30 = ssub.s32 2048, 2048
      %31 = vsyncadd [#allocation7], %s30
      %s32 = sshll.u32 [#allocation6], 4
      %s33 = int_to_ptr.vmem [resolvable:$true] %s32
      %38 = dma.hbm_to_vmem [thread:$0]  %s1, 2048, %s33, [#allocation7], 128, 128, 8
    $region9: #{tpu_custom_call.1} parent=1 // pred_fallthru
      _
    // Predicated region
    $region10: #{tpu_custom_call.1} parent=1 // pred_check
      _
    $region11: #{tpu_custom_call.1} parent=1 // pred_check_branch
      %40 = sbr.rel (0) target = $region13
    $region12: #{tpu_custom_call.1} parent=1 // pred_region
      _
    $region13: #{tpu_custom_call.1} parent=1 // pred_fallthru
      _
    // Predicated region
    $region14: #{tpu_custom_call.1} parent=1 // pred_check
      _
    $region15: #{tpu_custom_call.1} parent=1 // pred_check_branch
      %42 = sbr.rel (0) target = $region17
    $region16: #{tpu_custom_call.1} parent=1 // pred_region
      _
    $region17: #{tpu_custom_call.1} parent=1 // pred_fallthru
      _
    // Predicated region
    $region18: #{tpu_custom_call.1} parent=1 // pred_check
      _
    $region19: #{tpu_custom_call.1} parent=1 // pred_check_branch
      %44 = sbr.rel (0) target = $region21
    $region20: #{tpu_custom_call.1} parent=1 // pred_region
      _
    $region21: #{tpu_custom_call.1} parent=1 // pred_fallthru
      _
    // Predicated region
    $region22: #{tpu_custom_call.1} parent=1 // pred_check
      _
    $region23: #{tpu_custom_call.1} parent=1 // pred_check_branch
      %46 = sbr.rel (0) target = $region25
    $region24: #{tpu_custom_call.1} parent=1 // pred_region
      %s48 = ssub.s32 4096, 4096
      %49 = vsyncadd [#allocation7], %s48
      %s50 = sshll.u32 [#allocation8], 4
      %s51 = int_to_ptr.vmem [resolvable:$true] %s50
      %56 = dma.hbm_to_vmem [thread:$0]  %s5, 4096, %s51, [#allocation7], 128, 128, 8
    $region25: #{tpu_custom_call.1} parent=1 // pred_fallthru
      _
    // Predicated region
    $region26: #{tpu_custom_call.1} parent=1 // pred_check
      _
    $region27: #{tpu_custom_call.1} parent=1 // pred_check_branch
      %58 = sbr.rel (0) target = $region29
    $region28: #{tpu_custom_call.1} parent=1 // pred_region
      _
    $region29: #{tpu_custom_call.1} parent=1 // pred_fallthru
      _
    // Predicated region
    $region30: #{tpu_custom_call.1} parent=1 // pred_check
      _
    $region31: #{tpu_custom_call.1} parent=1 // pred_check_branch
      %60 = sbr.rel (0) target = $region33
    $region32: #{tpu_custom_call.1} parent=1 // pred_region
      %61 = dma.done [#allocation4], 256
    $region33: #{tpu_custom_call.1} parent=1 // pred_fallthru
      _
    // Predicated region
    $region34: #{tpu_custom_call.1} parent=1 // pred_check
      _
    $region35: #{tpu_custom_call.1} parent=1 // pred_check_branch
      %63 = sbr.rel (0) target = $region37
    $region36: #{tpu_custom_call.1} parent=1 // pred_region
      %64 = dma.done [#allocation7], 2048
    $region37: #{tpu_custom_call.1} parent=1 // pred_fallthru
      _
    // Predicated region
    $region38: #{tpu_custom_call.1} parent=1 // pred_check
      _
    $region39: #{tpu_custom_call.1} parent=1 // pred_check_branch
      %66 = sbr.rel (0) target = $region41
    $region40: #{tpu_custom_call.1} parent=1 // pred_region
      %67 = dma.done [#allocation7], 4096
    $region41: #{tpu_custom_call.1} parent=1 // pred_fallthru
      _
    %p68 = scmp.eq.s32.totalorder 0, 0
    // Predicated region
    $region42: #{tpu_custom_call.1} parent=1 // pred_check
      %p69 = pneg %p68
    $region43: #{tpu_custom_call.1} parent=1 // pred_check_branch
      %71 = sbr.rel (%p69) target = $region45
    $region44: #{tpu_custom_call.1} parent=1 // pred_region
      %v72 = vld [vmem:[#allocation3] sm:$0xff]
      %v73 = vld [vmem:[#allocation3 + $0x8] sm:$0xff]
      %v74 = vld [vmem:[#allocation6] sm:$0xff]
      %v75 = vld [vmem:[#allocation6 + $0x8] sm:$0xff]
      %v76 = vld [vmem:[#allocation6 + $0x10] sm:$0xff]
      %v77 = vld [vmem:[#allocation6 + $0x18] sm:$0xff]
      %v78 = vld [vmem:[#allocation6 + $0x20] sm:$0xff]
      %v79 = vld [vmem:[#allocation6 + $0x28] sm:$0xff]
      %v80 = vld [vmem:[#allocation6 + $0x30] sm:$0xff]
      %v81 = vld [vmem:[#allocation6 + $0x38] sm:$0xff]
      %v82 = vld [vmem:[#allocation6 + $0x40] sm:$0xff]
      %v83 = vld [vmem:[#allocation6 + $0x48] sm:$0xff]
      %v84 = vld [vmem:[#allocation6 + $0x50] sm:$0xff]
      %v85 = vld [vmem:[#allocation6 + $0x58] sm:$0xff]
      %v86 = vld [vmem:[#allocation6 + $0x60] sm:$0xff]
      %v87 = vld [vmem:[#allocation6 + $0x68] sm:$0xff]
      %v88 = vld [vmem:[#allocation6 + $0x70] sm:$0xff]
      %v89 = vld [vmem:[#allocation6 + $0x78] sm:$0xff]
      %v90 = vld [vmem:[%s2] sm:$0x1]
      %v92 = vlaneseq
      %v93 = vshrl.u32 %v92, 7
      %v94 = vsub.s32 0, %v93
      %v95 = vrot.slane %v90, %v94
      %97 = vmatprep.subr.mxu0 0.0
      %98 = vmatpush1.msra.mxu0 %v74
      %99 = vmatprep.subr.mxu0 0.0
      %100 = vmatpush1.msra.mxu0 %v75
      %101 = vmatprep.subr.mxu0 0.0
      %102 = vmatpush1.msra.mxu0 %v76
      %103 = vmatprep.subr.mxu0 0.0
      %104 = vmatpush1.msra.mxu0 %v77
      %105 = vmatprep.subr.mxu0 0.0
      %106 = vmatpush1.msra.mxu0 %v78
      %107 = vmatprep.subr.mxu0 0.0
      %108 = vmatpush1.msra.mxu0 %v79
      %109 = vmatprep.subr.mxu0 0.0
      %110 = vmatpush1.msra.mxu0 %v80
      %111 = vmatprep.subr.mxu0 0.0
      %112 = vmatpush1.msra.mxu0 %v81
      %113 = vmatprep.subr.mxu0 0.0
      %114 = vmatpush1.msra.mxu0 %v82
      %115 = vmatprep.subr.mxu0 0.0
      %116 = vmatpush1.msra.mxu0 %v83
      %117 = vmatprep.subr.mxu0 0.0
      %118 = vmatpush1.msra.mxu0 %v84
      %119 = vmatprep.subr.mxu0 0.0
      %120 = vmatpush1.msra.mxu0 %v85
      %121 = vmatprep.subr.mxu0 0.0
      %122 = vmatpush1.msra.mxu0 %v86
      %123 = vmatprep.subr.mxu0 0.0
      %124 = vmatpush1.msra.mxu0 %v87
      %125 = vmatprep.subr.mxu0 0.0
      %126 = vmatpush1.msra.mxu0 %v88
      %127 = vmatprep.subr.mxu0 0.0
      %128 = vmatpush1.msra.mxu0 %v89
      %129 = vmatprep.subr.mxu0 0.0
      %130 = vmatpush1.msra.mxu0 0.0
      %131 = vmatprep.subr.mxu0 0.0
      %132 = vmatpush1.msra.mxu0 0.0
      %133 = vmatprep.subr.mxu0 0.0
      %134 = vmatpush1.msra.mxu0 0.0
      %135 = vmatprep.subr.mxu0 0.0
      %136 = vmatpush1.msra.mxu0 0.0
      %137 = vmatprep.subr.mxu0 0.0
      %138 = vmatpush1.msra.mxu0 0.0
      %139 = vmatprep.subr.mxu0 0.0
      %140 = vmatpush1.msra.mxu0 0.0
      %141 = vmatprep.subr.mxu0 0.0
      %142 = vmatpush1.msra.mxu0 0.0
      %143 = vmatprep.subr.mxu0 0.0
      %144 = vmatpush1.msra.mxu0 0.0
      %145 = vmatprep.subr.mxu0 0.0
      %146 = vmatpush1.msra.mxu0 0.0
      %147 = vmatprep.subr.mxu0 0.0
      %148 = vmatpush1.msra.mxu0 0.0
      %149 = vmatprep.subr.mxu0 0.0
      %150 = vmatpush1.msra.mxu0 0.0
      %151 = vmatprep.subr.mxu0 0.0
      %152 = vmatpush1.msra.mxu0 0.0
      %153 = vmatprep.subr.mxu0 0.0
      %154 = vmatpush1.msra.mxu0 0.0
      %155 = vmatprep.subr.mxu0 0.0
      %156 = vmatpush1.msra.mxu0 0.0
      %157 = vmatprep.subr.mxu0 0.0
      %158 = vmatpush1.msra.mxu0 0.0
      %159 = vmatprep.subr.mxu0 0.0
      %160 = vmatpush1.msra.mxu0 0.0
      %161 = vmatprep.mubr.f32.mxu0 0.0
      %162 = vmatmul.mubr.f32.gmra.mrb[0].mxu0 %v72
      %v163 = vpop.f32.mrb[0].mxu0
      %v164 = vadd.f32 %v95, %v163
      %v165 = vpop.f32.mrb[0].mxu0
      %166 = vmatprep.mubr.f32.mxu0 0.0
      %167 = vmatmul.mubr.f32.gmra.mrb[0].mxu0 %v73
      %v168 = vpop.f32.mrb[0].mxu0
      %v169 = vadd.f32 %v95, %v168
      %v170 = vpop.f32.mrb[0].mxu0
      %171 = vdwg.mxu0
      %v172 = vmul.f32 %v164, 0.5
      %v173 = vmul.f32 %v169, 0.5
      %v174 = vmul.f32 %v164, 0.70710677
      %v175 = vmul.f32 %v169, 0.70710677
      %v176 = verf.f32.pop %v174
      %v177 = verf.f32.pop %v175
      %v178 = vadd.f32 %v176, 1.0
      %v179 = vadd.f32 %v177, 1.0
      %v180 = vmul.f32 %v172, %v178
      %v181 = vmul.f32 %v173, %v179
      %182 = vadd.xlane.f32.xlu0 %v180
      %v183 = vpop.xlane.xlu0 %182
      %184 = vadd.xlane.f32.xlu0 %v181
      %v185 = vpop.xlane.xlu0 %184
      %v186 = vmul.f32 %v183, 0.0078125
      %v187 = vmul.f32 %v185, 0.0078125
      %v188 = vsub.f32 %v180, %v186
      %v189 = vsub.f32 %v181, %v187
      %v190 = vmul.f32 %v188, %v188
      %v191 = vmul.f32 %v189, %v189
      %192 = vadd.xlane.f32.xlu0 %v190
      %v193 = vpop.xlane.xlu0 %192
      %194 = vadd.xlane.f32.xlu0 %v191
      %v195 = vpop.xlane.xlu0 %194
      %v196 = vmul.f32 %v193, 0.0078125
      %v197 = vmul.f32 %v195, 0.0078125
      %v198 = vadd.f32 %v196, 1e-12
      %v199 = vadd.f32 %v197, 1e-12
      %v200 = vrsqrt.pop %v198
      %v201 = vrsqrt.pop %v199
      %v202 = vmul.f32 %v188, %v200
      %v203 = vmul.f32 %v189, %v201
      %v204 = vld [vmem:[%s3] sm:$0x1]
      %v206 = vlaneseq
      %v207 = vshrl.u32 %v206, 7
      %v208 = vsub.s32 0, %v207
      %v209 = vrot.slane %v204, %v208
      %v211 = vmul.f32 %v202, %v209
      %v212 = vmul.f32 %v203, %v209
      %v213 = vld [vmem:[%s4] sm:$0x1]
      %v215 = vlaneseq
      %v216 = vshrl.u32 %v215, 7
      %v217 = vsub.s32 0, %v216
      %v218 = vrot.slane %v213, %v217
      %v220 = vadd.f32 %v211, %v218
      %v221 = vadd.f32 %v212, %v218
      %222 = vst [vmem:[#allocation2] sm:$0xff] %v220
      %223 = vst [vmem:[#allocation2 + $0x8] sm:$0xff] %v221
    $region45: #{tpu_custom_call.1} parent=1 // pred_fallthru
      _
    %v224 = vld [vmem:[#allocation2] sm:$0xff]
    %v225 = vld [vmem:[#allocation2 + $0x8] sm:$0xff]
    %v226 = vld [vmem:[#allocation8] sm:$0xff]
    %v227 = vld [vmem:[#allocation8 + $0x8] sm:$0xff]
    %v228 = vld [vmem:[#allocation8 + $0x10] sm:$0xff]
    %v229 = vld [vmem:[#allocation8 + $0x18] sm:$0xff]
    %v230 = vld [vmem:[#allocation8 + $0x20] sm:$0xff]
    %v231 = vld [vmem:[#allocation8 + $0x28] sm:$0xff]
    %v232 = vld [vmem:[#allocation8 + $0x30] sm:$0xff]
    %v233 = vld [vmem:[#allocation8 + $0x38] sm:$0xff]
    %v234 = vld [vmem:[#allocation8 + $0x40] sm:$0xff]
    %v235 = vld [vmem:[#allocation8 + $0x48] sm:$0xff]
    %v236 = vld [vmem:[#allocation8 + $0x50] sm:$0xff]
    %v237 = vld [vmem:[#allocation8 + $0x58] sm:$0xff]
    %v238 = vld [vmem:[#allocation8 + $0x60] sm:$0xff]
    %v239 = vld [vmem:[#allocation8 + $0x68] sm:$0xff]
    %v240 = vld [vmem:[#allocation8 + $0x70] sm:$0xff]
    %v241 = vld [vmem:[#allocation8 + $0x78] sm:$0xff]
    %v242 = vld [vmem:[#allocation8 + $0x80] sm:$0xff]
    %v243 = vld [vmem:[#allocation8 + $0x88] sm:$0xff]
    %v244 = vld [vmem:[#allocation8 + $0x90] sm:$0xff]
    %v245 = vld [vmem:[#allocation8 + $0x98] sm:$0xff]
    %v246 = vld [vmem:[#allocation8 + $0xa0] sm:$0xff]
    %v247 = vld [vmem:[#allocation8 + $0xa8] sm:$0xff]
    %v248 = vld [vmem:[#allocation8 + $0xb0] sm:$0xff]
    %v249 = vld [vmem:[#allocation8 + $0xb8] sm:$0xff]
    %v250 = vld [vmem:[#allocation8 + $0xc0] sm:$0xff]
    %v251 = vld [vmem:[#allocation8 + $0xc8] sm:$0xff]
    %v252 = vld [vmem:[#allocation8 + $0xd0] sm:$0xff]
    %v253 = vld [vmem:[#allocation8 + $0xd8] sm:$0xff]
    %v254 = vld [vmem:[#allocation8 + $0xe0] sm:$0xff]
    %v255 = vld [vmem:[#allocation8 + $0xe8] sm:$0xff]
    %v256 = vld [vmem:[#allocation8 + $0xf0] sm:$0xff]
    %v257 = vld [vmem:[#allocation8 + $0xf8] sm:$0xff]
    %v258 = vld [vmem:[%s6] sm:$0x3]
    %v260 = vlaneseq
    %v261 = vshrl.u32 %v260, 7
    %v262 = vsub.s32 0, %v261
    %v263 = vrot.slane %v258, %v262
    %v264 = vlaneseq
    %v265 = vshrl.u32 %v264, 7
    %v266 = vsub.s32 1, %v265
    %v267 = vrot.slane %v258, %v266
    %270 = vmatprep.subr.mxu0 0.0
    %271 = vmatpush1.xpose.msra.mxu0 %v226
    %272 = vmatprep.subr.mxu0 0.0
    %273 = vmatpush1.xpose.msra.mxu0 %v227
    %274 = vmatprep.subr.mxu0 0.0
    %275 = vmatpush1.xpose.msra.mxu0 %v228
    %276 = vmatprep.subr.mxu0 0.0
    %277 = vmatpush1.xpose.msra.mxu0 %v229
    %278 = vmatprep.subr.mxu0 0.0
    %279 = vmatpush1.xpose.msra.mxu0 %v230
    %280 = vmatprep.subr.mxu0 0.0
    %281 = vmatpush1.xpose.msra.mxu0 %v231
    %282 = vmatprep.subr.mxu0 0.0
    %283 = vmatpush1.xpose.msra.mxu0 %v232
    %284 = vmatprep.subr.mxu0 0.0
    %285 = vmatpush1.xpose.msra.mxu0 %v233
    %286 = vmatprep.subr.mxu0 0.0
    %287 = vmatpush1.xpose.msra.mxu0 %v234
    %288 = vmatprep.subr.mxu0 0.0
    %289 = vmatpush1.xpose.msra.mxu0 %v235
    %290 = vmatprep.subr.mxu0 0.0
    %291 = vmatpush1.xpose.msra.mxu0 %v236
    %292 = vmatprep.subr.mxu0 0.0
    %293 = vmatpush1.xpose.msra.mxu0 %v237
    %294 = vmatprep.subr.mxu0 0.0
    %295 = vmatpush1.xpose.msra.mxu0 %v238
    %296 = vmatprep.subr.mxu0 0.0
    %297 = vmatpush1.xpose.msra.mxu0 %v239
    %298 = vmatprep.subr.mxu0 0.0
    %299 = vmatpush1.xpose.msra.mxu0 %v240
    %300 = vmatprep.subr.mxu0 0.0
    %301 = vmatpush1.xpose.msra.mxu0 %v241
    %302 = vmatprep.subr.mxu0 0.0
    %303 = vmatpush1.xpose.msra.mxu0 %v242
    %304 = vmatprep.subr.mxu0 0.0
    %305 = vmatpush1.xpose.msra.mxu0 %v243
    %306 = vmatprep.subr.mxu0 0.0
    %307 = vmatpush1.xpose.msra.mxu0 %v244
    %308 = vmatprep.subr.mxu0 0.0
    %309 = vmatpush1.xpose.msra.mxu0 %v245
    %310 = vmatprep.subr.mxu0 0.0
    %311 = vmatpush1.xpose.msra.mxu0 %v246
    %312 = vmatprep.subr.mxu0 0.0
    %313 = vmatpush1.xpose.msra.mxu0 %v247
    %314 = vmatprep.subr.mxu0 0.0
    %315 = vmatpush1.xpose.msra.mxu0 %v248
    %316 = vmatprep.subr.mxu0 0.0
    %317 = vmatpush1.xpose.msra.mxu0 %v249
    %318 = vmatprep.subr.mxu0 0.0
    %319 = vmatpush1.xpose.msra.mxu0 %v250
    %320 = vmatprep.subr.mxu0 0.0
    %321 = vmatpush1.xpose.msra.mxu0 %v251
    %322 = vmatprep.subr.mxu0 0.0
    %323 = vmatpush1.xpose.msra.mxu0 %v252
    %324 = vmatprep.subr.mxu0 0.0
    %325 = vmatpush1.xpose.msra.mxu0 %v253
    %326 = vmatprep.subr.mxu0 0.0
    %327 = vmatpush1.xpose.msra.mxu0 %v254
    %328 = vmatprep.subr.mxu0 0.0
    %329 = vmatpush1.xpose.msra.mxu0 %v255
    %330 = vmatprep.subr.mxu0 0.0
    %331 = vmatpush1.xpose.msra.mxu0 %v256
    %332 = vmatprep.subr.mxu0 0.0
    %333 = vmatpush1.xpose.msra.mxu0 %v257
    %334 = vmatprep.mubr.f32.mxu0 0.0
    %335 = vmatmul.mubr.f32.gmra.mrb[0].mxu0 %v224
    %v336 = vpop.f32.mrb[0].mxu0
    %v337 = vadd.f32 %v263, %v336
    %v338 = vpop.f32.mrb[0].mxu0
    %v339 = vadd.f32 %v267, %v338
    %340 = vmatprep.mubr.f32.mxu0 0.0
    %341 = vmatmul.mubr.f32.gmra.mrb[0].mxu0 %v225
    %v342 = vpop.f32.mrb[0].mxu0
    %v343 = vadd.f32 %v263, %v342
    %v344 = vpop.f32.mrb[0].mxu0
    %v345 = vadd.f32 %v267, %v344
    %346 = vdwg.mxu0
    %347 = vst [vmem:[#allocation9] sm:$0xff] %v337
    %348 = vst [vmem:[#allocation9 + $0x8] sm:$0xff] %v339
    %349 = vst [vmem:[#allocation9 + $0x10] sm:$0xff] %v343
    %350 = vst [vmem:[#allocation9 + $0x18] sm:$0xff] %v345
    // Predicated region
    $region46: #{tpu_custom_call.1} parent=1 // pred_check
      _
    $region47: #{tpu_custom_call.1} parent=1 // pred_check_branch
      %352 = sbr.rel (0) target = $region49
    $region48: #{tpu_custom_call.1} parent=1 // pred_region
      %s354 = ssub.s32 512, 512
      %355 = vsyncadd [#allocation5], %s354
      %s356 = sshll.u32 [#allocation9], 4
      %s357 = int_to_ptr.vmem [resolvable:$true] %s356
      %362 = dma.vmem_to_hbm [thread:$0]  %s357, 512, %s7, [#allocation5], 256, 256, 16
    $region49: #{tpu_custom_call.1} parent=1 // pred_fallthru
      _
    // Predicated region
    $region50: #{tpu_custom_call.1} parent=1 // pred_check
      _
    $region51: #{tpu_custom_call.1} parent=1 // pred_check_branch
      %364 = sbr.rel (0) target = $region53
    $region52: #{tpu_custom_call.1} parent=1 // pred_region
      %365 = dma.done [#allocation5], 512
    $region53: #{tpu_custom_call.1} parent=1 // pred_fallthru
      _
    %366 = vsyncpa [#allocation4], 1
    %367 = vsyncpa [#allocation7], 1
    %368 = vsyncpa [#allocation5], 1

// kernel: tpu_custom_call.1
$region0: #{tpu_custom_call.1}
  #allocation0 [shape = 'u32[]', space=smem, size = 0x4, offset = 0x4, fixed_abs, tag = 'smem constant byte address 0x4 - core index']
  #allocation1 [shape = 'u32[144,128]{1,0:T(1,128)}', space=vmem, size = 0x12000, scoped, tag = 'internal scratch']
  #allocation2 [shape = 'f32[16,128]{1,0:T(8,128)}', space=vmem, size = 0x2000, scoped, tag = 'scratch operand']
  %s0 = inlined_call_operand.hbm [shape: f32[16,128], index: 0, kind: input, shape index: {}]
  %s1 = inlined_call_operand.hbm [shape: f32[128,128], index: 1, kind: input, shape index: {}]
  %s2 = inlined_call_operand.vmem [shape: f32[1,128], index: 2, kind: input, shape index: {}]
  %s3 = inlined_call_operand.vmem [shape: f32[1,128], index: 3, kind: input, shape index: {}]
  %s4 = inlined_call_operand.vmem [shape: f32[1,128], index: 4, kind: input, shape index: {}]
  %s5 = inlined_call_operand.hbm [shape: f32[256,128], index: 5, kind: input, shape index: {}]
  %s6 = inlined_call_operand.vmem [shape: f32[1,256], index: 6, kind: input, shape index: {}]
  %s7 = inlined_call_operand.hbm [shape: f32[16,256], index: 7, kind: output, shape index: {}]
  %s8 = sld [smem:[#allocation0]]
  $region54: #{tpu_custom_call.1} parent=0
    _
  %s10 = ssub.s32 1, %s8
  %s11 = scalar_select 0, %s10, %s8
  $region1: #{tpu_custom_call.1} parent=0
    #allocation3 [shape = 'u8[8192]{0}', space=vmem, size = 0x2000, scoped, tag = 'input window, operand 0, single buffered']
    #allocation4 [shape = 's32[1]{0}', space=sflag, size = 0x4, scoped, tag = 'scoped memory for tpu_custom_call.1']
    #allocation5 [shape = 's32[1]{0}', space=sflag, size = 0x4, scoped, tag = 'scoped memory for tpu_custom_call.1']
    #allocation6 [shape = 'u8[65536]{0}', space=vmem, size = 0x10000, scoped, tag = 'input window, operand 1, single buffered']
    #allocation7 [shape = 's32[1]{0}', space=sflag, size = 0x4, scoped, tag = 'scoped memory for tpu_custom_call.1']
    #allocation8 [shape = 'u8[131072]{0}', space=vmem, size = 0x20000, scoped, tag = 'input window, operand 5, single buffered']
    #allocation9 [shape = 'u8[16384]{0}', space=vmem, size = 0x4000, scoped, tag = 'output window, operand 0, single buffered']
    %12 = vsyncpa [#allocation4], 0
    %13 = vsyncpa [#allocation7], 0
    %14 = vsyncpa [#allocation5], 0
    // Predicated region
    $region2: #{tpu_custom_call.1} parent=1 // pred_check
      _
    $region3: #{tpu_custom_call.1} parent=1 // pred_check_branch
      %16 = sbr.rel (0) target = $region5
    $region4: #{tpu_custom_call.1} parent=1 // pred_region
      %s18 = ssub.s32 256, 256
      %19 = vsyncadd [#allocation4], %s18
      %s20 = sshll.u32 [#allocation3], 4
      %s21 = int_to_ptr.vmem [resolvable:$true] %s20
      %26 = dma.hbm_to_vmem [thread:$0]  %s0, 256, %s21, [#allocation4], 128, 128, 8
    $region5: #{tpu_custom_call.1} parent=1 // pred_fallthru
      _
    // Predicated region
    $region6: #{tpu_custom_call.1} parent=1 // pred_check
      _
    $region7: #{tpu_custom_call.1} parent=1 // pred_check_branch
      %28 = sbr.rel (0) target = $region9
    $region8: #{tpu_custom_call.1} parent=1 // pred_region
      %s30 = ssub.s32 2048, 2048
      %31 = vsyncadd [#allocation7], %s30
      %s32 = sshll.u32 [#allocation6], 4
      %s33 = int_to_ptr.vmem [resolvable:$true] %s32
      %38 = dma.hbm_to_vmem [thread:$0]  %s1, 2048, %s33, [#allocation7], 128, 128, 8
    $region9: #{tpu_custom_call.1} parent=1 // pred_fallthru
      _
    // Predicated region
    $region10: #{tpu_custom_call.1} parent=1 // pred_check
      _
    $region11: #{tpu_custom_call.1} parent=1 // pred_check_branch
      %40 = sbr.rel (0) target = $region13
    $region12: #{tpu_custom_call.1} parent=1 // pred_region
      _
    $region13: #{tpu_custom_call.1} parent=1 // pred_fallthru
      _
    // Predicated region
    $region14: #{tpu_custom_call.1} parent=1 // pred_check
      _
    $region15: #{tpu_custom_call.1} parent=1 // pred_check_branch
      %42 = sbr.rel (0) target = $region17
    $region16: #{tpu_custom_call.1} parent=1 // pred_region
      _
    $region17: #{tpu_custom_call.1} parent=1 // pred_fallthru
      _
    // Predicated region
    $region18: #{tpu_custom_call.1} parent=1 // pred_check
      _
    $region19: #{tpu_custom_call.1} parent=1 // pred_check_branch
      %44 = sbr.rel (0) target = $region21
    $region20: #{tpu_custom_call.1} parent=1 // pred_region
      _
    $region21: #{tpu_custom_call.1} parent=1 // pred_fallthru
      _
    // Predicated region
    $region22: #{tpu_custom_call.1} parent=1 // pred_check
      _
    $region23: #{tpu_custom_call.1} parent=1 // pred_check_branch
      %46 = sbr.rel (0) target = $region25
    $region24: #{tpu_custom_call.1} parent=1 // pred_region
      %s48 = ssub.s32 4096, 4096
      %49 = vsyncadd [#allocation7], %s48
      %s50 = sshll.u32 [#allocation8], 4
      %s51 = int_to_ptr.vmem [resolvable:$true] %s50
      %56 = dma.hbm_to_vmem [thread:$0]  %s5, 4096, %s51, [#allocation7], 128, 128, 8
    $region25: #{tpu_custom_call.1} parent=1 // pred_fallthru
      _
    // Predicated region
    $region26: #{tpu_custom_call.1} parent=1 // pred_check
      _
    $region27: #{tpu_custom_call.1} parent=1 // pred_check_branch
      %58 = sbr.rel (0) target = $region29
    $region28: #{tpu_custom_call.1} parent=1 // pred_region
      _
    $region29: #{tpu_custom_call.1} parent=1 // pred_fallthru
      _
    // Predicated region
    $region30: #{tpu_custom_call.1} parent=1 // pred_check
      _
    $region31: #{tpu_custom_call.1} parent=1 // pred_check_branch
      %60 = sbr.rel (0) target = $region33
    $region32: #{tpu_custom_call.1} parent=1 // pred_region
      %61 = dma.done [#allocation4], 256
    $region33: #{tpu_custom_call.1} parent=1 // pred_fallthru
      _
    // Predicated region
    $region34: #{tpu_custom_call.1} parent=1 // pred_check
      _
    $region35: #{tpu_custom_call.1} parent=1 // pred_check_branch
      %63 = sbr.rel (0) target = $region37
    $region36: #{tpu_custom_call.1} parent=1 // pred_region
      %64 = dma.done [#allocation7], 2048
    $region37: #{tpu_custom_call.1} parent=1 // pred_fallthru
      _
    // Predicated region
    $region38: #{tpu_custom_call.1} parent=1 // pred_check
      _
    $region39: #{tpu_custom_call.1} parent=1 // pred_check_branch
      %66 = sbr.rel (0) target = $region41
    $region40: #{tpu_custom_call.1} parent=1 // pred_region
      %67 = dma.done [#allocation7], 4096
    $region41: #{tpu_custom_call.1} parent=1 // pred_fallthru
      _
    %p68 = scmp.eq.s32.totalorder 0, 0
    // Predicated region
    $region42: #{tpu_custom_call.1} parent=1 // pred_check
      %p69 = pneg %p68
    $region43: #{tpu_custom_call.1} parent=1 // pred_check_branch
      %71 = sbr.rel (%p69) target = $region45
    $region44: #{tpu_custom_call.1} parent=1 // pred_region
      %v72 = vld [vmem:[#allocation3] sm:$0xff]
      %v73 = vld [vmem:[#allocation3 + $0x8] sm:$0xff]
      %v74 = vld [vmem:[#allocation6] sm:$0xff]
      %v75 = vld [vmem:[#allocation6 + $0x8] sm:$0xff]
      %v76 = vld [vmem:[#allocation6 + $0x10] sm:$0xff]
      %v77 = vld [vmem:[#allocation6 + $0x18] sm:$0xff]
      %v78 = vld [vmem:[#allocation6 + $0x20] sm:$0xff]
      %v79 = vld [vmem:[#allocation6 + $0x28] sm:$0xff]
      %v80 = vld [vmem:[#allocation6 + $0x30] sm:$0xff]
      %v81 = vld [vmem:[#allocation6 + $0x38] sm:$0xff]
      %v82 = vld [vmem:[#allocation6 + $0x40] sm:$0xff]
      %v83 = vld [vmem:[#allocation6 + $0x48] sm:$0xff]
      %v84 = vld [vmem:[#allocation6 + $0x50] sm:$0xff]
      %v85 = vld [vmem:[#allocation6 + $0x58] sm:$0xff]
      %v86 = vld [vmem:[#allocation6 + $0x60] sm:$0xff]
      %v87 = vld [vmem:[#allocation6 + $0x68] sm:$0xff]
      %v88 = vld [vmem:[#allocation6 + $0x70] sm:$0xff]
      %v89 = vld [vmem:[#allocation6 + $0x78] sm:$0xff]
      %v90 = vld [vmem:[%s2] sm:$0x1]
      %v92 = vlaneseq
      %v93 = vshrl.u32 %v92, 7
      %v94 = vsub.s32 0, %v93
      %v95 = vrot.slane %v90, %v94
      %97 = vmatprep.subr.mxu0 0.0
      %98 = vmatpush1.msra.mxu0 %v74
      %99 = vmatprep.subr.mxu0 0.0
      %100 = vmatpush1.msra.mxu0 %v75
      %101 = vmatprep.subr.mxu0 0.0
      %102 = vmatpush1.msra.mxu0 %v76
      %103 = vmatprep.subr.mxu0 0.0
      %104 = vmatpush1.msra.mxu0 %v77
      %105 = vmatprep.subr.mxu0 0.0
      %106 = vmatpush1.msra.mxu0 %v78
      %107 = vmatprep.subr.mxu0 0.0
      %108 = vmatpush1.msra.mxu0 %v79
      %109 = vmatprep.subr.mxu0 0.0
      %110 = vmatpush1.msra.mxu0 %v80
      %111 = vmatprep.subr.mxu0 0.0
      %112 = vmatpush1.msra.mxu0 %v81
      %113 = vmatprep.subr.mxu0 0.0
      %114 = vmatpush1.msra.mxu0 %v82
      %115 = vmatprep.subr.mxu0 0.0
      %116 = vmatpush1.msra.mxu0 %v83
      %117 = vmatprep.subr.mxu0 0.0
      %118 = vmatpush1.msra.mxu0 %v84
      %119 = vmatprep.subr.mxu0 0.0
      %120 = vmatpush1.msra.mxu0 %v85
      %121 = vmatprep.subr.mxu0 0.0
      %122 = vmatpush1.msra.mxu0 %v86
      %123 = vmatprep.subr.mxu0 0.0
      %124 = vmatpush1.msra.mxu0 %v87
      %125 = vmatprep.subr.mxu0 0.0
      %126 = vmatpush1.msra.mxu0 %v88
      %127 = vmatprep.subr.mxu0 0.0
      %128 = vmatpush1.msra.mxu0 %v89
      %129 = vmatprep.subr.mxu0 0.0
      %130 = vmatpush1.msra.mxu0 0.0
      %131 = vmatprep.subr.mxu0 0.0
      %132 = vmatpush1.msra.mxu0 0.0
      %133 = vmatprep.subr.mxu0 0.0
      %134 = vmatpush1.msra.mxu0 0.0
      %135 = vmatprep.subr.mxu0 0.0
      %136 = vmatpush1.msra.mxu0 0.0
      %137 = vmatprep.subr.mxu0 0.0
      %138 = vmatpush1.msra.mxu0 0.0
      %139 = vmatprep.subr.mxu0 0.0
      %140 = vmatpush1.msra.mxu0 0.0
      %141 = vmatprep.subr.mxu0 0.0
      %142 = vmatpush1.msra.mxu0 0.0
      %143 = vmatprep.subr.mxu0 0.0
      %144 = vmatpush1.msra.mxu0 0.0
      %145 = vmatprep.subr.mxu0 0.0
      %146 = vmatpush1.msra.mxu0 0.0
      %147 = vmatprep.subr.mxu0 0.0
      %148 = vmatpush1.msra.mxu0 0.0
      %149 = vmatprep.subr.mxu0 0.0
      %150 = vmatpush1.msra.mxu0 0.0
      %151 = vmatprep.subr.mxu0 0.0
      %152 = vmatpush1.msra.mxu0 0.0
      %153 = vmatprep.subr.mxu0 0.0
      %154 = vmatpush1.msra.mxu0 0.0
      %155 = vmatprep.subr.mxu0 0.0
      %156 = vmatpush1.msra.mxu0 0.0
      %157 = vmatprep.subr.mxu0 0.0
      %158 = vmatpush1.msra.mxu0 0.0
      %159 = vmatprep.subr.mxu0 0.0
      %160 = vmatpush1.msra.mxu0 0.0
      %161 = vmatprep.mubr.f32.mxu0 0.0
      %162 = vmatmul.mubr.f32.gmra.mrb[0].mxu0 %v72
      %v163 = vpop.f32.mrb[0].mxu0
      %v164 = vadd.f32 %v95, %v163
      %v165 = vpop.f32.mrb[0].mxu0
      %166 = vmatprep.mubr.f32.mxu0 0.0
      %167 = vmatmul.mubr.f32.gmra.mrb[0].mxu0 %v73
      %v168 = vpop.f32.mrb[0].mxu0
      %v169 = vadd.f32 %v95, %v168
      %v170 = vpop.f32.mrb[0].mxu0
      %171 = vdwg.mxu0
      %v172 = vmul.f32 %v164, 0.5
      %v173 = vmul.f32 %v169, 0.5
      %v174 = vmul.f32 %v164, 0.70710677
      %v175 = vmul.f32 %v169, 0.70710677
      %v176 = verf.f32.pop %v174
      %v177 = verf.f32.pop %v175
      %v178 = vadd.f32 %v176, 1.0
      %v179 = vadd.f32 %v177, 1.0
      %v180 = vmul.f32 %v172, %v178
      %v181 = vmul.f32 %v173, %v179
      %182 = vadd.xlane.f32.xlu0 %v180
      %v183 = vpop.xlane.xlu0 %182
      %184 = vadd.xlane.f32.xlu0 %v181
      %v185 = vpop.xlane.xlu0 %184
      %v186 = vmul.f32 %v183, 0.0078125
      %v187 = vmul.f32 %v185, 0.0078125
      %v188 = vsub.f32 %v180, %v186
      %v189 = vsub.f32 %v181, %v187
      %v190 = vmul.f32 %v188, %v188
      %v191 = vmul.f32 %v189, %v189
      %192 = vadd.xlane.f32.xlu0 %v190
      %v193 = vpop.xlane.xlu0 %192
      %194 = vadd.xlane.f32.xlu0 %v191
      %v195 = vpop.xlane.xlu0 %194
      %v196 = vmul.f32 %v193, 0.0078125
      %v197 = vmul.f32 %v195, 0.0078125
      %v198 = vadd.f32 %v196, 1e-12
      %v199 = vadd.f32 %v197, 1e-12
      %v200 = vrsqrt.pop %v198
      %v201 = vrsqrt.pop %v199
      %v202 = vmul.f32 %v188, %v200
      %v203 = vmul.f32 %v189, %v201
      %v204 = vld [vmem:[%s3] sm:$0x1]
      %v206 = vlaneseq
      %v207 = vshrl.u32 %v206, 7
      %v208 = vsub.s32 0, %v207
      %v209 = vrot.slane %v204, %v208
      %v211 = vmul.f32 %v202, %v209
      %v212 = vmul.f32 %v203, %v209
      %v213 = vld [vmem:[%s4] sm:$0x1]
      %v215 = vlaneseq
      %v216 = vshrl.u32 %v215, 7
      %v217 = vsub.s32 0, %v216
      %v218 = vrot.slane %v213, %v217
      %v220 = vadd.f32 %v211, %v218
      %v221 = vadd.f32 %v212, %v218
      %222 = vst [vmem:[#allocation2] sm:$0xff] %v220
      %223 = vst [vmem:[#allocation2 + $0x8] sm:$0xff] %v221
    $region45: #{tpu_custom_call.1} parent=1 // pred_fallthru
      _
    %v224 = vld [vmem:[#allocation2] sm:$0xff]
    %v225 = vld [vmem:[#allocation2 + $0x8] sm:$0xff]
    %v226 = vld [vmem:[#allocation8] sm:$0xff]
    %v227 = vld [vmem:[#allocation8 + $0x8] sm:$0xff]
    %v228 = vld [vmem:[#allocation8 + $0x10] sm:$0xff]
    %v229 = vld [vmem:[#allocation8 + $0x18] sm:$0xff]
    %v230 = vld [vmem:[#allocation8 + $0x20] sm:$0xff]
    %v231 = vld [vmem:[#allocation8 + $0x28] sm:$0xff]
    %v232 = vld [vmem:[#allocation8 + $0x30] sm:$0xff]
    %v233 = vld [vmem:[#allocation8 + $0x38] sm:$0xff]
    %v234 = vld [vmem:[#allocation8 + $0x40] sm:$0xff]
    %v235 = vld [vmem:[#allocation8 + $0x48] sm:$0xff]
    %v236 = vld [vmem:[#allocation8 + $0x50] sm:$0xff]
    %v237 = vld [vmem:[#allocation8 + $0x58] sm:$0xff]
    %v238 = vld [vmem:[#allocation8 + $0x60] sm:$0xff]
    %v239 = vld [vmem:[#allocation8 + $0x68] sm:$0xff]
    %v240 = vld [vmem:[#allocation8 + $0x70] sm:$0xff]
    %v241 = vld [vmem:[#allocation8 + $0x78] sm:$0xff]
    %v242 = vld [vmem:[#allocation8 + $0x80] sm:$0xff]
    %v243 = vld [vmem:[#allocation8 + $0x88] sm:$0xff]
    %v244 = vld [vmem:[#allocation8 + $0x90] sm:$0xff]
    %v245 = vld [vmem:[#allocation8 + $0x98] sm:$0xff]
    %v246 = vld [vmem:[#allocation8 + $0xa0] sm:$0xff]
    %v247 = vld [vmem:[#allocation8 + $0xa8] sm:$0xff]
    %v248 = vld [vmem:[#allocation8 + $0xb0] sm:$0xff]
    %v249 = vld [vmem:[#allocation8 + $0xb8] sm:$0xff]
    %v250 = vld [vmem:[#allocation8 + $0xc0] sm:$0xff]
    %v251 = vld [vmem:[#allocation8 + $0xc8] sm:$0xff]
    %v252 = vld [vmem:[#allocation8 + $0xd0] sm:$0xff]
    %v253 = vld [vmem:[#allocation8 + $0xd8] sm:$0xff]
    %v254 = vld [vmem:[#allocation8 + $0xe0] sm:$0xff]
    %v255 = vld [vmem:[#allocation8 + $0xe8] sm:$0xff]
    %v256 = vld [vmem:[#allocation8 + $0xf0] sm:$0xff]
    %v257 = vld [vmem:[#allocation8 + $0xf8] sm:$0xff]
    %v258 = vld [vmem:[%s6] sm:$0x3]
    %v260 = vlaneseq
    %v261 = vshrl.u32 %v260, 7
    %v262 = vsub.s32 0, %v261
    %v263 = vrot.slane %v258, %v262
    %v264 = vlaneseq
    %v265 = vshrl.u32 %v264, 7
    %v266 = vsub.s32 1, %v265
    %v267 = vrot.slane %v258, %v266
    %270 = vmatprep.subr.mxu0 0.0
    %271 = vmatpush1.xpose.msra.mxu0 %v226
    %272 = vmatprep.subr.mxu0 0.0
    %273 = vmatpush1.xpose.msra.mxu0 %v227
    %274 = vmatprep.subr.mxu0 0.0
    %275 = vmatpush1.xpose.msra.mxu0 %v228
    %276 = vmatprep.subr.mxu0 0.0
    %277 = vmatpush1.xpose.msra.mxu0 %v229
    %278 = vmatprep.subr.mxu0 0.0
    %279 = vmatpush1.xpose.msra.mxu0 %v230
    %280 = vmatprep.subr.mxu0 0.0
    %281 = vmatpush1.xpose.msra.mxu0 %v231
    %282 = vmatprep.subr.mxu0 0.0
    %283 = vmatpush1.xpose.msra.mxu0 %v232
    %284 = vmatprep.subr.mxu0 0.0
    %285 = vmatpush1.xpose.msra.mxu0 %v233
    %286 = vmatprep.subr.mxu0 0.0
    %287 = vmatpush1.xpose.msra.mxu0 %v234
    %288 = vmatprep.subr.mxu0 0.0
    %289 = vmatpush1.xpose.msra.mxu0 %v235
    %290 = vmatprep.subr.mxu0 0.0
    %291 = vmatpush1.xpose.msra.mxu0 %v236
    %292 = vmatprep.subr.mxu0 0.0
    %293 = vmatpush1.xpose.msra.mxu0 %v237
    %294 = vmatprep.subr.mxu0 0.0
    %295 = vmatpush1.xpose.msra.mxu0 %v238
    %296 = vmatprep.subr.mxu0 0.0
    %297 = vmatpush1.xpose.msra.mxu0 %v239
    %298 = vmatprep.subr.mxu0 0.0
    %299 = vmatpush1.xpose.msra.mxu0 %v240
    %300 = vmatprep.subr.mxu0 0.0
    %301 = vmatpush1.xpose.msra.mxu0 %v241
    %302 = vmatprep.subr.mxu0 0.0
    %303 = vmatpush1.xpose.msra.mxu0 %v242
    %304 = vmatprep.subr.mxu0 0.0
    %305 = vmatpush1.xpose.msra.mxu0 %v243
    %306 = vmatprep.subr.mxu0 0.0
    %307 = vmatpush1.xpose.msra.mxu0 %v244
    %308 = vmatprep.subr.mxu0 0.0
    %309 = vmatpush1.xpose.msra.mxu0 %v245
    %310 = vmatprep.subr.mxu0 0.0
    %311 = vmatpush1.xpose.msra.mxu0 %v246
    %312 = vmatprep.subr.mxu0 0.0
    %313 = vmatpush1.xpose.msra.mxu0 %v247
    %314 = vmatprep.subr.mxu0 0.0
    %315 = vmatpush1.xpose.msra.mxu0 %v248
    %316 = vmatprep.subr.mxu0 0.0
    %317 = vmatpush1.xpose.msra.mxu0 %v249
    %318 = vmatprep.subr.mxu0 0.0
    %319 = vmatpush1.xpose.msra.mxu0 %v250
    %320 = vmatprep.subr.mxu0 0.0
    %321 = vmatpush1.xpose.msra.mxu0 %v251
    %322 = vmatprep.subr.mxu0 0.0
    %323 = vmatpush1.xpose.msra.mxu0 %v252
    %324 = vmatprep.subr.mxu0 0.0
    %325 = vmatpush1.xpose.msra.mxu0 %v253
    %326 = vmatprep.subr.mxu0 0.0
    %327 = vmatpush1.xpose.msra.mxu0 %v254
    %328 = vmatprep.subr.mxu0 0.0
    %329 = vmatpush1.xpose.msra.mxu0 %v255
    %330 = vmatprep.subr.mxu0 0.0
    %331 = vmatpush1.xpose.msra.mxu0 %v256
    %332 = vmatprep.subr.mxu0 0.0
    %333 = vmatpush1.xpose.msra.mxu0 %v257
    %334 = vmatprep.mubr.f32.mxu0 0.0
    %335 = vmatmul.mubr.f32.gmra.mrb[0].mxu0 %v224
    %v336 = vpop.f32.mrb[0].mxu0
    %v337 = vadd.f32 %v263, %v336
    %v338 = vpop.f32.mrb[0].mxu0
    %v339 = vadd.f32 %v267, %v338
    %340 = vmatprep.mubr.f32.mxu0 0.0
    %341 = vmatmul.mubr.f32.gmra.mrb[0].mxu0 %v225
    %v342 = vpop.f32.mrb[0].mxu0
    %v343 = vadd.f32 %v263, %v342
    %v344 = vpop.f32.mrb[0].mxu0
    %v345 = vadd.f32 %v267, %v344
    %346 = vdwg.mxu0
    %347 = vst [vmem:[#allocation9] sm:$0xff] %v337
    %348 = vst [vmem:[#allocation9 + $0x8] sm:$0xff] %v339
    %349 = vst [vmem:[#allocation9 + $0x10] sm:$0xff] %v343
    %350 = vst [vmem:[#allocation9 + $0x18] sm:$0xff] %v345
    // Predicated region
    $region46: #{tpu_custom_call.1} parent=1 // pred_check
      _
    $region47: #{tpu_custom_call.1} parent=1 // pred_check_branch
      %352 = sbr.rel (0) target = $region49
    $region48: #{tpu_custom_call.1} parent=1 // pred_region
      %s354 = ssub.s32 512, 512
      %355 = vsyncadd [#allocation5], %s354
      %s356 = sshll.u32 [#allocation9], 4
      %s357 = int_to_ptr.vmem [resolvable:$true] %s356
      %362 = dma.vmem_to_hbm [thread:$0]  %s357, 512, %s7, [#allocation5], 256, 256, 16
    $region49: #{tpu_custom_call.1} parent=1 // pred_fallthru
      _
    // Predicated region
    $region50: #{tpu_custom_call.1} parent=1 // pred_check
      _
    $region51: #{tpu_custom_call.1} parent=1 // pred_check_branch
      %364 = sbr.rel (0) target = $region53
    $region52: #{tpu_custom_call.1} parent=1 // pred_region
      %365 = dma.done [#allocation5], 512
    $region53: #{tpu_custom_call.1} parent=1 // pred_fallthru
      _
    %366 = vsyncpa [#allocation4], 1
    %367 = vsyncpa [#allocation7], 1
    %368 = vsyncpa [#allocation5], 1

</llo_original>
